<compile_context>
chip_gen: v6e
topology: v6e:2x2x1
jax: 0.10.0
libtpu: 0.0.40
codegen_flags: <defaults>
</compile_context>

<pallas_src>
import functools

import jax
import jax.numpy as jnp
from jax import lax
from jax.experimental import pallas as pl
from jax.experimental.pallas import tpu as pltpu


def _focal_factor(f, gamma):
    """(clamped 1-p) ** gamma with integer-gamma specialization (no EUP pow)."""
    g = float(gamma)
    if g == int(g) and 0 <= int(g) <= 8:
        n = int(g)
        if n == 0:
            return jnp.ones_like(f)
        out = f
        for _ in range(n - 1):
            out = out * f            # plain VPU multiplies (gamma=2 -> f*f)
        return out
    # pow lowers to exp(g*log(f)); guard f==0 (p==1) against a transient -inf.
    f = jnp.maximum(f, jnp.float32(1e-30))
    return jnp.power(f, jnp.float32(g))


def _focal_loss_kernel(logits_ref, labels_ref, out_ref, *,
                       gamma, n_total, tn, needs_mask):
    """One grid step: a (TN, C, HW) slab of logits + (TN, 1, HW) labels.

    Writes the (negative) per-lane partial sums of this slab as a (1, 1, HW)
    lane-resident vector (final cross-lane sum + mean happen in XLA).
    """
    x = logits_ref[...].astype(jnp.float32)             # (TN, C, HW)
    lbl = labels_ref[...]                               # (TN, 1, HW) int32

    # Numerically stable logsumexp over the class axis (axis=1).
    m = jnp.max(x, axis=1, keepdims=True)               # (TN, 1, HW)
    s = jnp.sum(jnp.exp(x - m), axis=1, keepdims=True)  # (TN, 1, HW)

    # Gather logit at the label class: small (1, C, 1) iota, broadcast compare.
    c = x.shape[1]
    cls_iota = lax.broadcasted_iota(jnp.int32, (1, c, 1), 1)
    x_lbl = jnp.sum(jnp.where(cls_iota == lbl, x, 0.0), axis=1, keepdims=True)

    # Per-row focal term only (no full (C, HW) pow/exp).
    logp = (x_lbl - m) - jnp.log(s)                      # log_softmax at label
    p = jnp.exp(logp)                                    # softmax at label
    f = jnp.maximum(1.0 - p, 0.0)                        # clamp vs rounding
    focal = _focal_factor(f, gamma) * logp               # (TN, 1, HW)

    if needs_mask:
        # Tail block when N % tn != 0: zero contributions from padded rows.
        row = lax.broadcasted_iota(jnp.int32, (tn, 1, 1), 0)
        valid = (pl.program_id(0) * tn + row) < n_total
        focal = jnp.where(valid, focal, 0.0)

    # Reduce only over the batch (sublane-block) axis; keep lanes resident.
    out_ref[...] = -jnp.sum(focal, axis=0, keepdims=True)  # (1, 1, HW)


def _vmem_capacity_bytes():
    """Detected per-core VMEM; conservative (v7x) fallback if unavailable."""
    try:
        cap = getattr(pltpu.get_tpu_info(), "vmem_capacity_bytes", None)
        if cap:
            return int(cap)
    except Exception:
        pass
    return 64 << 20


def _per_image_vmem_cost(c, hw, in_itemsize):
    in_img = c * hw * in_itemsize          # logits slab (input dtype)
    f32_img = c * hw * 4                   # f32 upcast / exp / one-hot temps
    lbl_img = hw * 4
    # 2x double-buffered inputs + ~3 tile-sized f32 intermediates of headroom.
    return 2 * (in_img + lbl_img) + 3 * f32_img


def _pick_batch_tile(n, c, hw, in_itemsize, vmem_cap, min_grid=4):
    """Batch tile: fits the VMEM budget AND keeps >= min_grid pipeline steps."""
    per_img = max(1, _per_image_vmem_cost(c, hw, in_itemsize))
    budget = int(vmem_cap * 0.6)           # leave headroom for spills / output
    max_tn_vmem = max(1, budget // per_img)
    max_tn_grid = max(1, pl.cdiv(n, min_grid))   # >= ~4 steps (2 TCs on v7x)
    return max(1, min(n, max_tn_vmem, max_tn_grid))


def _vmem_limit_bytes(tn, c, hw, in_itemsize, vmem_cap):
    in_tile = tn * c * hw * in_itemsize
    f32_tile = tn * c * hw * 4
    lbl_tile = tn * hw * 4
    out_tile = hw * 4
    need = 2 * (in_tile + lbl_tile + out_tile) + 3 * f32_tile + (1 << 20)
    return int(min(max(need, 16 << 20), int(vmem_cap * 0.9)))


def focal_loss(logits, labels, gamma=2.0, batch_tile=None, cast_logits_to=None):
    """logits: (N, C, H, W) float; labels: (N, H, W) int. Returns scalar f32.

    cast_logits_to: optionally stream the logits as a narrower dtype (e.g.
    jnp.bfloat16) — halves HBM traffic; in-kernel math stays f32.
    """
    N, C, H, W = logits.shape
    HW = H * W

    if cast_logits_to is not None:
        logits = logits.astype(cast_logits_to)

    # Free reshapes only (contiguous) -- no transpose, no pad, no extra HBM copy.
    x = logits.reshape(N, C, HW)
    y = labels.reshape(N, 1, HW).astype(jnp.int32)
    itemsize = x.dtype.itemsize

    vmem_cap = _vmem_capacity_bytes()
    if batch_tile is None:
        tn = _pick_batch_tile(N, C, HW, itemsize, vmem_cap)
    else:
        tn = int(min(max(int(batch_tile), 1), N))
    grid = pl.cdiv(N, tn)
    needs_mask = (N % tn) != 0

    # TODO(synk): extremely large H*W (slab > several MiB per image) would need
    # an extra spatial grid axis; the UFLD classification head keeps H*W small.
    # TODO(synk): when H*W < 128 (e.g. UFLD 18*4=72) lanes run partially masked;
    # a lane-folding layout would recover VPU throughput on v7x.

    kernel = functools.partial(
        _focal_loss_kernel, gamma=float(gamma), n_total=N, tn=tn,
        needs_mask=needs_mask)

    cost = pl.CostEstimate(
        flops=6 * N * C * HW,
        transcendentals=N * C * HW + 2 * N * HW,
        bytes_accessed=N * C * HW * itemsize + N * HW * 4 + grid * HW * 4)

    partials = pl.pallas_call(
        kernel,
        out_shape=jax.ShapeDtypeStruct((grid, 1, HW), jnp.float32),
        grid_spec=pltpu.PrefetchScalarGridSpec(
            num_scalar_prefetch=0,
            grid=(grid,),
            in_specs=[
                pl.BlockSpec((tn, C, HW), lambda g: (g, 0, 0)),
                pl.BlockSpec((tn, 1, HW), lambda g: (g, 0, 0)),
            ],
            out_specs=pl.BlockSpec((1, 1, HW), lambda g: (g, 0, 0)),
        ),
        compiler_params=pltpu.CompilerParams(
            dimension_semantics=("parallel",),          # no cross-step state
            vmem_limit_bytes=_vmem_limit_bytes(tn, C, HW, itemsize, vmem_cap)),
        cost_estimate=cost,
    )(x, y)

    # TODO(synk): NLLLoss `weight` and `ignore_index=-100` not implemented
    # (module is constructed with weight=None; UFLD labels are in-range).
    return jnp.sum(partials) / jnp.float32(N * HW)


def _reference_focal_loss(logits, labels, gamma):
    """Pure-JAX reference mirroring the PyTorch module (weight=None)."""
    logits = logits.astype(jnp.float32)
    scores = jax.nn.softmax(logits, axis=1)
    factor = (1.0 - scores) ** gamma
    log_score = factor * jax.nn.log_softmax(logits, axis=1)
    gathered = jnp.take_along_axis(log_score, labels[:, None, :, :], axis=1)
    return -jnp.mean(gathered)


if __name__ == "__main__":
    key = jax.random.PRNGKey(0)
    k1, k2 = jax.random.split(key)

    N, C, H, W = 4, 8, 16, 16          # small NCHW shapes (classes on dim 1)
    logits = jax.random.normal(k1, (N, C, H, W), dtype=jnp.float32)
    labels = jax.random.randint(k2, (N, H, W), 0, C, dtype=jnp.int32)

    # (a) Auto tile policy (min-grid rule -> 4 steps here), integer gamma path.
    loss = jax.block_until_ready(focal_loss(logits, labels, gamma=2.0))
    ref = _reference_focal_loss(logits, labels, 2.0)
    assert jnp.allclose(loss, ref, rtol=1e-4, atol=1e-5), (loss, ref)

    # (b) Non-divisor batch tile (masked tail block) + non-integer gamma (pow).
    loss_b = jax.block_until_ready(
        focal_loss(logits, labels, gamma=1.5, batch_tile=3))
    ref_b = _reference_focal_loss(logits, labels, 1.5)
    assert jnp.allclose(loss_b, ref_b, rtol=1e-4, atol=1e-5), (loss_b, ref_b)

    # (c) bf16 input stream (memory-bound win); compare vs bf16-rounded ref.
    loss_c = jax.block_until_ready(
        focal_loss(logits, labels, gamma=2.0, cast_logits_to=jnp.bfloat16))
    ref_c = _reference_focal_loss(
        logits.astype(jnp.bfloat16).astype(jnp.float32), labels, 2.0)
    assert jnp.allclose(loss_c, ref_c, rtol=1e-3, atol=1e-4), (loss_c, ref_c)

    print("KERNEL_OK")
</pallas_src>

<mosaic_0001>
module attributes {stable_mosaic.version = 11 : i64} {
  func.func @_focal_loss_kernel(%arg0: i32, %arg1: memref<1x8x256xf32, #tpu.memory_space<vmem>>, %arg2: memref<1x1x256xi32, #tpu.memory_space<vmem>>, %arg3: memref<1x1x256xf32, #tpu.memory_space<vmem>>) attributes {dimension_semantics = [#tpu.dimension_semantics<parallel>], iteration_bounds = array<i64: 4>, scalar_prefetch = 0 : i64, scratch_operands = 0 : i64, tpu.core_type = #tpu.core_type<tc>, window_params = [{transform_indices = @transform_0, window_bounds = array<i64: 1, 8, 256>}, {transform_indices = @transform_1, window_bounds = array<i64: 1, 1, 256>}, {transform_indices = @transform_2, window_bounds = array<i64: 1, 1, 256>}]} {
    %c0 = arith.constant 0 : index
    %c0_0 = arith.constant 0 : index
    %c0_1 = arith.constant 0 : index
    %0 = vector.load %arg1[%c0, %c0_0, %c0_1] : memref<1x8x256xf32, #tpu.memory_space<vmem>>, vector<1x8x256xf32>
    %c0_2 = arith.constant 0 : index
    %c0_3 = arith.constant 0 : index
    %c0_4 = arith.constant 0 : index
    %1 = vector.load %arg2[%c0_2, %c0_3, %c0_4] : memref<1x1x256xi32, #tpu.memory_space<vmem>>, vector<1x1x256xi32>
    %cst = arith.constant dense<0xFF800000> : vector<1x256xf32>
    %2 = vector.multi_reduction <maximumf>, %0, %cst [1] : vector<1x8x256xf32> to vector<1x256xf32>
    %3 = vector.shape_cast %2 : vector<1x256xf32> to vector<1x1x256xf32>
    %4 = vector.broadcast %3 : vector<1x1x256xf32> to vector<1x8x256xf32>
    %5 = arith.subf %0, %4 : vector<1x8x256xf32>
    %6 = math.exp %5 : vector<1x8x256xf32>
    %cst_5 = arith.constant dense<0.000000e+00> : vector<1x256xf32>
    %7 = vector.multi_reduction <add>, %6, %cst_5 [1] : vector<1x8x256xf32> to vector<1x256xf32>
    %8 = vector.shape_cast %7 : vector<1x256xf32> to vector<1x1x256xf32>
    %9 = tpu.iota {dimensions = array<i32: 1>} : vector<1x8x1xi32>
    %10 = vector.broadcast %9 : vector<1x8x1xi32> to vector<1x8x256xi32>
    %11 = vector.broadcast %1 : vector<1x1x256xi32> to vector<1x8x256xi32>
    %12 = arith.cmpi eq, %10, %11 : vector<1x8x256xi32>
    %cst_6 = arith.constant 0.000000e+00 : f32
    %13 = vector.broadcast %cst_6 : f32 to vector<1x8x256xf32>
    %14 = arith.select %12, %0, %13 : vector<1x8x256xi1>, vector<1x8x256xf32>
    %cst_7 = arith.constant dense<0.000000e+00> : vector<1x256xf32>
    %15 = vector.multi_reduction <add>, %14, %cst_7 [1] : vector<1x8x256xf32> to vector<1x256xf32>
    %16 = vector.shape_cast %15 : vector<1x256xf32> to vector<1x1x256xf32>
    %17 = arith.subf %16, %3 : vector<1x1x256xf32>
    %18 = math.log %8 : vector<1x1x256xf32>
    %19 = arith.subf %17, %18 : vector<1x1x256xf32>
    %20 = math.exp %19 : vector<1x1x256xf32>
    %cst_8 = arith.constant 1.000000e+00 : f32
    %21 = vector.broadcast %cst_8 : f32 to vector<1x1x256xf32>
    %22 = arith.subf %21, %20 : vector<1x1x256xf32>
    %cst_9 = arith.constant 0.000000e+00 : f32
    %23 = vector.broadcast %cst_9 : f32 to vector<1x1x256xf32>
    %24 = arith.maximumf %22, %23 : vector<1x1x256xf32>
    %25 = arith.mulf %24, %24 : vector<1x1x256xf32>
    %26 = arith.mulf %25, %19 : vector<1x1x256xf32>
    %cst_10 = arith.constant dense<0.000000e+00> : vector<1x256xf32>
    %27 = vector.multi_reduction <add>, %26, %cst_10 [0] : vector<1x1x256xf32> to vector<1x256xf32>
    %28 = vector.shape_cast %27 : vector<1x256xf32> to vector<1x1x256xf32>
    %cst_11 = arith.constant 0.000000e+00 : f32
    %29 = vector.broadcast %cst_11 : f32 to vector<1x1x256xf32>
    %30 = arith.subf %29, %28 : vector<1x1x256xf32>
    %c0_12 = arith.constant 0 : index
    %c0_13 = arith.constant 0 : index
    %c0_14 = arith.constant 0 : index
    %31 = vector.load %arg3[%c0_12, %c0_13, %c0_14] : memref<1x1x256xf32, #tpu.memory_space<vmem>>, vector<1x1x256xf32>
    tpu.vector_store %arg3[%c0_12, %c0_13, %c0_14], %30 {strides = array<i32>} : memref<1x1x256xf32, #tpu.memory_space<vmem>>, vector<1x1x256xf32>,
    return
  }
  func.func @transform_0(%arg0: i32) -> (i32, i32, i32) {
    %c0_i32 = arith.constant 0 : i32
    %c0_i32_0 = arith.constant 0 : i32
    %c0_i32_1 = arith.constant 0 : i32
    return %arg0, %c0_i32, %c0_i32_0 : i32, i32, i32
  }
  func.func @transform_1(%arg0: i32) -> (i32, i32, i32) {
    %c0_i32 = arith.constant 0 : i32
    %c0_i32_0 = arith.constant 0 : i32
    %c0_i32_1 = arith.constant 0 : i32
    return %arg0, %c0_i32, %c0_i32_0 : i32, i32, i32
  }
  func.func @transform_2(%arg0: i32) -> (i32, i32, i32) {
    %c0_i32 = arith.constant 0 : i32
    %c0_i32_0 = arith.constant 0 : i32
    %c0_i32_1 = arith.constant 0 : i32
    return %arg0, %c0_i32, %c0_i32_0 : i32, i32, i32
  }
}

</mosaic_0001>

<llo_original>
// kernel: tpu_custom_call.1
$region0: #{tpu_custom_call.1}
  #allocation0 [shape = 'u32[]', space=smem, size = 0x4, offset = 0x4, fixed_abs, tag = 'smem constant byte address 0x4 - core index']
  #allocation1 [shape = 'u32[144,128]{1,0:T(1,128)}', space=vmem, size = 0x12000, scoped, tag = 'internal scratch']
  %s0 = inlined_call_operand.hbm [shape: f32[4,8,256], index: 0, kind: input, shape index: {}]
  %s1 = inlined_call_operand.hbm [shape: s32[4,1,256], index: 1, kind: input, shape index: {}]
  %s2 = inlined_call_operand.hbm [shape: f32[4,1,256], index: 2, kind: output, shape index: {}]
  %s3 = sld [smem:[#allocation0]]
  $region49: #{tpu_custom_call.1} parent=0
    _
  %s5 = ssub.s32 1, %s3
  %s6 = scalar_select 0, %s5, %s3
  $region1: #{tpu_custom_call.1} parent=0
    #allocation2 [shape = 'u8[16384]{0}', space=vmem, size = 0x4000, scoped, tag = 'input window, operand 0']
    #allocation3 [shape = 's32[2]{0}', space=sflag, size = 0x8, scoped, tag = 'scoped memory for tpu_custom_call.1']
    #allocation4 [shape = 's32[2]{0}', space=sflag, size = 0x8, scoped, tag = 'scoped memory for tpu_custom_call.1']
    #allocation5 [shape = 'u8[2048]{0}', space=vmem, size = 0x800, scoped, tag = 'input window, operand 1']
    #allocation6 [shape = 's32[2]{0}', space=sflag, size = 0x8, scoped, tag = 'scoped memory for tpu_custom_call.1']
    #allocation7 [shape = 'u8[2048]{0}', space=vmem, size = 0x800, scoped, tag = 'output window, operand 0']
    %7 = vsyncpa [#allocation3], 0
    %s8 = scalar_lea.sflag [#allocation3], 1
    %9 = vsyncpa %s8, 0
    %10 = vsyncpa [#allocation6], 0
    %s11 = scalar_lea.sflag [#allocation6], 1
    %12 = vsyncpa %s11, 0
    %13 = vsyncpa [#allocation4], 0
    %s14 = scalar_lea.sflag [#allocation4], 1
    %15 = vsyncpa %s14, 0
    loop: start=0, step=1, limit=6
    $region2: #{tpu_custom_call.1} parent=1 // loop_pre_header
      _
    $region3: #{tpu_custom_call.1} parent=1 // loop_header
      %s17 = sphi 0, %s21
      %p18 = scmp.ge.s32.totalorder %s17, 6
      %s27 = sphi 0, %s29
      %s30 = sphi 0, %s27
      %s31 = sphi 0, %s30
      %s47 = sphi 0, %s31
      %s53 = sphi 0, %s55
      %s56 = sphi 0, %s53
      %s57 = sphi 0, %s56
      %s73 = sphi 0, %s57
      %s79 = sphi 0, %s81
      %s82 = sphi 0, %s79
      %s83 = sphi 0, %s82
      %s99 = sphi 0, %s83
    $region4: #{tpu_custom_call.1} parent=1 // loop_header_branch
      %20 = sbr.rel (%p18) target = $region8
    $region5: #{tpu_custom_call.1} parent=1 // loop_body
      %s22 = ssub.s32 %s17, 1
      %s23 = ssub.s32 %s17, 2
      %s24 = sadd.s32 %s17, 1
      %s25 = ssub.s32 %s17, %s24
      %p26 = scmp.eq.s32.totalorder %s25, 0
      %s28 = sadd.s32 %s27, 1
      %s29 = scalar_select %p26, %s27, %s28
      %p32 = pneg %p26
      %p33 = scmp.eq.s32.totalorder %s17, 3
      %p34 = por %p32, %p33
      %p35 = scmp.ne.s32.totalorder %s27, %s30
      %p36 = scmp.eq.s32.totalorder %s17, 0
      %p37 = por %p35, %p36
      %p38 = scmp.ne.s32.totalorder %s27, %s30
      %p39 = scmp.eq.s32.totalorder %s22, 3
      %p40 = por %p38, %p39
      %p41 = scmp.ne.s32.totalorder %s30, %s31
      %p42 = scmp.eq.s32.totalorder %s22, 0
      %p43 = por %p41, %p42
      %p44 = scmp.ne.s32.totalorder %s30, %s31
      %p45 = scmp.eq.s32.totalorder %s23, 3
      %p46 = por %p44, %p45
      %p48 = scmp.ne.s32.totalorder %s31, %s47
      %p49 = scmp.eq.s32.totalorder %s23, 0
      %p50 = por %p48, %p49
      %s51 = ssub.s32 %s17, %s24
      %p52 = scmp.eq.s32.totalorder %s51, 0
      %s54 = sadd.s32 %s53, 1
      %s55 = scalar_select %p52, %s53, %s54
      %p58 = pneg %p52
      %p59 = scmp.eq.s32.totalorder %s17, 3
      %p60 = por %p58, %p59
      %p61 = scmp.ne.s32.totalorder %s53, %s56
      %p62 = scmp.eq.s32.totalorder %s17, 0
      %p63 = por %p61, %p62
      %p64 = scmp.ne.s32.totalorder %s53, %s56
      %p65 = scmp.eq.s32.totalorder %s22, 3
      %p66 = por %p64, %p65
      %p67 = scmp.ne.s32.totalorder %s56, %s57
      %p68 = scmp.eq.s32.totalorder %s22, 0
      %p69 = por %p67, %p68
      %p70 = scmp.ne.s32.totalorder %s56, %s57
      %p71 = scmp.eq.s32.totalorder %s23, 3
      %p72 = por %p70, %p71
      %p74 = scmp.ne.s32.totalorder %s57, %s73
      %p75 = scmp.eq.s32.totalorder %s23, 0
      %p76 = por %p74, %p75
      %s77 = ssub.s32 %s17, %s24
      %p78 = scmp.eq.s32.totalorder %s77, 0
      %s80 = sadd.s32 %s79, 1
      %s81 = scalar_select %p78, %s79, %s80
      %p84 = pneg %p78
      %p85 = scmp.eq.s32.totalorder %s17, 3
      %p86 = por %p84, %p85
      %p87 = scmp.ne.s32.totalorder %s79, %s82
      %p88 = scmp.eq.s32.totalorder %s17, 0
      %p89 = por %p87, %p88
      %p90 = scmp.ne.s32.totalorder %s79, %s82
      %p91 = scmp.eq.s32.totalorder %s22, 3
      %p92 = por %p90, %p91
      %p93 = scmp.ne.s32.totalorder %s82, %s83
      %p94 = scmp.eq.s32.totalorder %s22, 0
      %p95 = por %p93, %p94
      %p96 = scmp.ne.s32.totalorder %s82, %s83
      %p97 = scmp.eq.s32.totalorder %s23, 3
      %p98 = por %p96, %p97
      %p100 = scmp.ne.s32.totalorder %s83, %s99
      %p101 = scmp.eq.s32.totalorder %s23, 0
      %p102 = por %p100, %p101
      %p103 = scmp.le.s32.totalorder 1, %s17
      %p104 = scmp.lt.s32.totalorder %s17, 5
      %p105 = pnand %p103, %p104
      %p106 = pneg %p105
      // Predicated region
      $region9: #{tpu_custom_call.1} parent=5 // pred_check
        _
      $region10: #{tpu_custom_call.1} parent=5 // pred_check_branch
        %108 = sbr.rel (%p105) target = $region12
      $region11: #{tpu_custom_call.1} parent=5 // pred_region
        %s109 = ssub.s32 %s17, 1
      $region12: #{tpu_custom_call.1} parent=5 // pred_fallthru
        _
      %p110 = scmp.lt.s32.totalorder %s17, 4
      // Predicated region
      $region13: #{tpu_custom_call.1} parent=5 // pred_check
        %p111 = pneg %p110
      $region14: #{tpu_custom_call.1} parent=5 // pred_check_branch
        %113 = sbr.rel (%p111) target = $region16
      $region15: #{tpu_custom_call.1} parent=5 // pred_region
        // Predicated region
        $region17: #{tpu_custom_call.1} parent=15 // pred_check
          %p114 = pneg %p37
        $region18: #{tpu_custom_call.1} parent=15 // pred_check_branch
          %116 = sbr.rel (%p114) target = $region20
        $region19: #{tpu_custom_call.1} parent=15 // pred_region
          %s117 = sand.u32 %s27, 1
          %s118 = scalar_lea.sflag [#allocation3], %s117
          %s119 = sand.u32 %s27, 1
          %s120 = smul.addr %s119, 16
          %s121 = scalar_lea.vmem [#allocation2], %s120
          %s123 = ssub.s32 256, 256
          %124 = vsyncadd %s118, %s123
          %s125 = smul.addr %s17, 2
          %s126 = smul.addr %s125, 128
          %s127 = scalar_lea.hbm %s0, %s126
          %s129 = sshll.u32 %s121, 4
          %s130 = int_to_ptr.vmem [resolvable:$true] %s129
          %132 = dma.hbm_to_vmem [thread:$0]  %s127, 256, %s130, %s118
        $region20: #{tpu_custom_call.1} parent=15 // pred_fallthru
          _
        // Predicated region
        $region21: #{tpu_custom_call.1} parent=15 // pred_check
          %p133 = pneg %p63
        $region22: #{tpu_custom_call.1} parent=15 // pred_check_branch
          %135 = sbr.rel (%p133) target = $region24
        $region23: #{tpu_custom_call.1} parent=15 // pred_region
          %s136 = sand.u32 %s53, 1
          %s137 = scalar_lea.sflag [#allocation6], %s136
          %s138 = sand.u32 %s53, 1
          %s139 = smul.addr %s138, 2
          %s140 = scalar_lea.vmem [#allocation5], %s139
          %s142 = ssub.s32 32, 32
          %143 = vsyncadd %s137, %s142
          %s144 = smul.addr %s17, 2
          %s145 = smul.addr %s144, 16
          %s146 = scalar_lea.hbm %s1, %s145
          %s148 = sshll.u32 %s140, 4
          %s149 = int_to_ptr.vmem [resolvable:$true] %s148
          %151 = dma.hbm_to_vmem [thread:$0]  %s146, 32, %s149, %s137
        $region24: #{tpu_custom_call.1} parent=15 // pred_fallthru
          _
      $region16: #{tpu_custom_call.1} parent=5 // pred_fallthru
        _
      %p152 = scmp.le.s32.totalorder 1, %s17
      %p153 = scmp.lt.s32.totalorder %s17, 5
      %p154 = pnand %p152, %p153
      %p155 = pneg %p154
      // Predicated region
      $region25: #{tpu_custom_call.1} parent=5 // pred_check
        _
      $region26: #{tpu_custom_call.1} parent=5 // pred_check_branch
        %157 = sbr.rel (%p154) target = $region28
      $region27: #{tpu_custom_call.1} parent=5 // pred_region
        %s158 = ssub.s32 %s17, 1
        %s159 = sand.u32 %s30, 1
        %s160 = scalar_lea.sflag [#allocation3], %s159
        %s161 = sand.u32 %s30, 1
        %s162 = smul.addr %s161, 16
        %s163 = scalar_lea.vmem [#allocation2], %s162
        // Predicated region
        $region29: #{tpu_custom_call.1} parent=27 // pred_check
          %p164 = pneg %p43
        $region30: #{tpu_custom_call.1} parent=27 // pred_check_branch
          %166 = sbr.rel (%p164) target = $region32
        $region31: #{tpu_custom_call.1} parent=27 // pred_region
          %167 = dma.done %s160, 256
        $region32: #{tpu_custom_call.1} parent=27 // pred_fallthru
          _
        %s168 = sand.u32 %s56, 1
        %s169 = scalar_lea.sflag [#allocation6], %s168
        %s170 = sand.u32 %s56, 1
        %s171 = smul.addr %s170, 2
        %s172 = scalar_lea.vmem [#allocation5], %s171
        // Predicated region
        $region33: #{tpu_custom_call.1} parent=27 // pred_check
          %p173 = pneg %p69
        $region34: #{tpu_custom_call.1} parent=27 // pred_check_branch
          %175 = sbr.rel (%p173) target = $region36
        $region35: #{tpu_custom_call.1} parent=27 // pred_region
          %176 = dma.done %s169, 32
        $region36: #{tpu_custom_call.1} parent=27 // pred_fallthru
          _
        %s177 = sand.u32 %s30, 1
        %s178 = scalar_lea.sflag [#allocation3], %s177
        %s179 = sand.u32 %s30, 1
        %s180 = smul.addr %s179, 16
        %s181 = scalar_lea.vmem [#allocation2], %s180
        %p182 = pneg %p43
        %p183 = pneg %p40
        %s184 = sand.u32 %s56, 1
        %s185 = scalar_lea.sflag [#allocation6], %s184
        %s186 = sand.u32 %s56, 1
        %s187 = smul.addr %s186, 2
        %s188 = scalar_lea.vmem [#allocation5], %s187
        %p189 = pneg %p69
        %p190 = pneg %p66
        %p191 = pneg %p95
        %p192 = pneg %p92
        %s193 = sand.u32 %s82, 1
        %s194 = scalar_lea.sflag [#allocation4], %s193
        %s195 = sand.u32 %s82, 1
        %s196 = smul.addr %s195, 2
        %s197 = scalar_lea.vmem [#allocation7], %s196
        %v198 = vld [vmem:[%s163] sm:$0xff]
        %v199 = vld [vmem:[%s163 + $0x8] sm:$0xff]
        %v200 = vld [vmem:[%s172] sm:$0x3]
        %v201 = vrot.slane %v198, 4
        %v202 = vmax.f32 %v198, %v201
        %v203 = vrot.slane %v202, 2
        %v204 = vmax.f32 %v202, %v203
        %v205 = vrot.slane %v204, 1
        %v206 = vmax.f32 %v204, %v205
        %v207 = vrot.slane %v199, 4
        %v208 = vmax.f32 %v199, %v207
        %v209 = vrot.slane %v208, 2
        %v210 = vmax.f32 %v208, %v209
        %v211 = vrot.slane %v210, 1
        %v212 = vmax.f32 %v210, %v211
        %v213 = vsub.f32 %v198, %v206
        %v214 = vsub.f32 %v199, %v212
        %v215 = vmul.f32 %v213, 1.442695
        %v216 = vpow.pop %v215
        %v217 = vmul.f32 %v214, 1.442695
        %v218 = vpow.pop %v217
        %v219 = vrot.slane %v216, 4
        %v220 = vadd.f32 %v216, %v219
        %v221 = vrot.slane %v220, 2
        %v222 = vadd.f32 %v220, %v221
        %v223 = vrot.slane %v222, 1
        %v224 = vadd.f32 %v222, %v223
        %v225 = vrot.slane %v218, 4
        %v226 = vadd.f32 %v218, %v225
        %v227 = vrot.slane %v226, 2
        %v228 = vadd.f32 %v226, %v227
        %v229 = vrot.slane %v228, 1
        %v230 = vadd.f32 %v228, %v229
        %v231 = vlaneseq
        %v232 = vshrl.u32 %v231, 7
        %v233 = vlaneseq
        %v234 = vshrl.u32 %v233, 7
        %v235 = vsub.s32 0, %v234
        %v236 = vrot.slane %v200, %v235
        %v237 = vlaneseq
        %v238 = vshrl.u32 %v237, 7
        %v239 = vsub.s32 1, %v238
        %v240 = vrot.slane %v200, %v239
        %vm241 = vcmp.eq.s32.totalorder %v232, %v236
        %vm242 = vcmp.eq.s32.totalorder %v232, %v240
        %v243 = vsel %vm241, %v198, 0.0
        %v244 = vsel %vm242, %v199, 0.0
        %v245 = vrot.slane %v243, 4
        %v246 = vadd.f32 %v243, %v245
        %v247 = vrot.slane %v246, 2
        %v248 = vadd.f32 %v246, %v247
        %v249 = vrot.slane %v248, 1
        %v250 = vadd.f32 %v248, %v249
        %v251 = vrot.slane %v244, 4
        %v252 = vadd.f32 %v244, %v251
        %v253 = vrot.slane %v252, 2
        %v254 = vadd.f32 %v252, %v253
        %v255 = vrot.slane %v254, 1
        %v256 = vadd.f32 %v254, %v255
        %v257 = vsub.f32 %v250, %v206
        %v258 = vsub.f32 %v256, %v212
        %v259 = vlog2.pop %v224
        %v260 = vmul.f32 %v259, 0.6931472
        %v261 = vlog2.pop %v230
        %v262 = vmul.f32 %v261, 0.6931472
        %v263 = vsub.f32 %v257, %v260
        %v264 = vsub.f32 %v258, %v262
        %v265 = vmul.f32 %v263, 1.442695
        %v266 = vpow.pop %v265
        %v267 = vmul.f32 %v264, 1.442695
        %v268 = vpow.pop %v267
        %v269 = vsub.f32 1.0, %v266
        %v270 = vsub.f32 1.0, %v268
        %v271 = vmax.f32 %v269, 0.0
        %v272 = vmax.f32 %v270, 0.0
        %v273 = vmul.f32 %v271, %v271
        %v274 = vmul.f32 %v272, %v272
        %v275 = vmul.f32 %v273, %v263
        %v276 = vmul.f32 %v274, %v264
        %v277 = vadd.f32 %v275, 0.0
        %v278 = vadd.f32 %v276, 0.0
        %v279 = vsub.f32 0.0, %v277
        %v280 = vsub.f32 0.0, %v278
        %v283 = vcombine.low %v279, %v280
        %v285 = vunpack.c.l.s4 1966171168
        %v286 = vunpack.c.0.s8 %v285
        %v287 = vlaneseq
        %v288 = vshrl.u32 %v287, 7
        %v289 = vsub.s32 %v286, %v288
        %v290 = vrot.slane %v283, %v289
        %v292 = vunpack.c.l.s4 1966171168
        %v293 = vunpack.c.0.s8 %v292
        %v294 = vlaneseq
        %v295 = vshrl.u32 %v294, 7
        %v296 = vsub.s32 %v293, %v295
        %v297 = vrot.slane %v290, %v296
        %v299 = vlaneseq
        %vm300 = vcmp.ge.s32.totalorder %v299, 0
        %vm301 = vcmp.lt.s32.totalorder %v299, 256
        %vm302 = vmand %vm300, %vm301
        %303 = vst.msk [vmem:[%s197] sm:$0x3] %vm302, %v297
        %s304 = sand.u32 %s82, 1
        %s305 = scalar_lea.sflag [#allocation4], %s304
        %s306 = sand.u32 %s82, 1
        %s307 = smul.addr %s306, 2
        %s308 = scalar_lea.vmem [#allocation7], %s307
        // Predicated region
        $region37: #{tpu_custom_call.1} parent=27 // pred_check
          %p309 = pneg %p92
        $region38: #{tpu_custom_call.1} parent=27 // pred_check_branch
          %311 = sbr.rel (%p309) target = $region40
        $region39: #{tpu_custom_call.1} parent=27 // pred_region
          %s313 = ssub.s32 32, 32
          %314 = vsyncadd %s305, %s313
          %s315 = smul.addr %s22, 2
          %s316 = smul.addr %s315, 16
          %s317 = scalar_lea.hbm %s2, %s316
          %s319 = sshll.u32 %s308, 4
          %s320 = int_to_ptr.vmem [resolvable:$true] %s319
          %322 = dma.vmem_to_hbm [thread:$0]  %s320, 32, %s317, %s305
        $region40: #{tpu_custom_call.1} parent=27 // pred_fallthru
          _
      $region28: #{tpu_custom_call.1} parent=5 // pred_fallthru
        _
      %p323 = scmp.le.s32.totalorder 2, %s17
      // Predicated region
      $region41: #{tpu_custom_call.1} parent=5 // pred_check
        %p324 = pneg %p323
      $region42: #{tpu_custom_call.1} parent=5 // pred_check_branch
        %326 = sbr.rel (%p324) target = $region44
      $region43: #{tpu_custom_call.1} parent=5 // pred_region
        %s327 = ssub.s32 %s17, 2
        // Predicated region
        $region45: #{tpu_custom_call.1} parent=43 // pred_check
          %p328 = pneg %p98
        $region46: #{tpu_custom_call.1} parent=43 // pred_check_branch
          %330 = sbr.rel (%p328) target = $region48
        $region47: #{tpu_custom_call.1} parent=43 // pred_region
          %s331 = sand.u32 %s83, 1
          %s332 = scalar_lea.sflag [#allocation4], %s331
          %s333 = sand.u32 %s83, 1
          %s334 = smul.addr %s333, 2
          %s335 = scalar_lea.vmem [#allocation7], %s334
          %336 = dma.done %s332, 32
        $region48: #{tpu_custom_call.1} parent=43 // pred_fallthru
          _
      $region44: #{tpu_custom_call.1} parent=5 // pred_fallthru
        _
    $region6: #{tpu_custom_call.1} parent=1 // loop_footer
      %s21 = sadd.s32 1, %s17
    $region7: #{tpu_custom_call.1} parent=1 // loop_footer_branch
      %16 = sbr.rel target = $region3
    $region8: #{tpu_custom_call.1} parent=1 // loop_exit
      _
    %337 = vsyncpa [#allocation3], 1
    %s338 = scalar_lea.sflag [#allocation3], 1
    %339 = vsyncpa %s338, 1
    %340 = vsyncpa [#allocation6], 1
    %s341 = scalar_lea.sflag [#allocation6], 1
    %342 = vsyncpa %s341, 1
    %343 = vsyncpa [#allocation4], 1
    %s344 = scalar_lea.sflag [#allocation4], 1
    %345 = vsyncpa %s344, 1

</llo_original>
